<compile_context>
chip_gen: v6e
topology: v6e:2x2x1
jax: 0.10.0
libtpu: 0.0.40
codegen_flags: <defaults>
</compile_context>

<pallas_src>
import functools

import jax
import jax.numpy as jnp
from jax.experimental import pallas as pl
from jax.experimental.pallas import tpu as pltpu

N_IN = 784
N_HID = 128
N_OUT = 10
N_OUT_PAD = 128    # lane-dense output slab


def _round_up(x, m):
    return (x + m - 1) // m * m


def mlp_kernel(x_ref, w1_ref, b1_ref, w2_ref, b2_ref, o_ref):
    # x:  (TB, 784) f32  (streamed)     w1: (784, 128) bf16 (VMEM-resident)
    # b1: (1, 128)  f32  (resident)     w2: (128, 128) f32  (pad cols = 0)
    # b2: (1, 128)  f32  (pad cols = -1e30)
    # o:  (TB, 128) bf16

    # Cast x to bf16 in-kernel (x is read from HBM exactly once, as f32).
    x_bf = x_ref[...].astype(jnp.bfloat16)

    # linear1 + ReLU (bf16 MXU matmul, f32 accumulate; Mosaic handles K=784).
    h = jnp.dot(x_bf, w1_ref[...], preferred_element_type=jnp.float32)
    h = jnp.maximum(h + b1_ref[...], 0.0)

    # linear2 (full 128x128 MXU tile thanks to output padding).
    logits = jnp.dot(h, w2_ref[...], preferred_element_type=jnp.float32) + b2_ref[...]

    # Numerically stable softmax over 128 lanes; pad lanes carry ~-1e30 bias
    # so exp() underflows to exactly 0 and they never touch the denominator.
    m = jnp.max(logits, axis=1, keepdims=True)
    e = jnp.exp(logits - m)
    denom = jnp.sum(e, axis=1, keepdims=True)
    o_ref[...] = (e * pl.reciprocal(denom, approx=True)).astype(o_ref.dtype)


def prepare_params(w1, b1, w2, b2):
    """Pad / cast parameters ONCE (hoisted out of the per-call path).

    w1: (784, 128), b1: (128,), w2: (128, 10), b2: (10,)  (weights transposed
    relative to nn.Linear storage, i.e. ready for x @ w)."""
    w1_p = w1.astype(jnp.bfloat16)                             # (784, 128)
    b1_p = b1.reshape(1, N_HID).astype(jnp.float32)            # (1, 128)
    w2_p = (jnp.zeros((N_HID, N_OUT_PAD), jnp.float32)
            .at[:, :N_OUT].set(w2.astype(jnp.float32)))        # (128, 128)
    b2_p = (jnp.full((1, N_OUT_PAD), -1e30, jnp.float32)
            .at[0, :N_OUT].set(b2.reshape(-1).astype(jnp.float32)))
    return w1_p, b1_p, w2_p, b2_p


@functools.partial(jax.jit, static_argnames=("tb", "core_parallel"))
def simple_nn_forward(x, w1_p, b1_p, w2_p, b2_p, *, tb=2048, core_parallel=False):
    """x: (B, 1, 28, 28) or (B, 784) float32.  Params from prepare_params().
    Returns (B, 10) f32 probabilities.

    tb: batch tile (sweep 2048-4096 on v6e/v7x, 1024-2048 on v5e).
    core_parallel: set True on v7x (2 TensorCores/chip) to shard batch tiles
    across cores; leave False on single-TC v5e/v6e."""
    x2d = x.reshape(-1, N_IN).astype(jnp.float32)
    B = x2d.shape[0]

    # Batch tile: multiple of 16 sublanes (safe for the bf16 output tiling),
    # capped for small batches.
    tb_eff = _round_up(min(tb, _round_up(B, 16)), 16)
    Bp = _round_up(B, tb_eff)
    x_p = jnp.pad(x2d, ((0, Bp - B), (0, 0)))   # no-op copy when Bp == B

    if core_parallel:
        dim_sem = (pltpu.CORE_PARALLEL,)   # shard batch tiles across v7x TCs
    else:
        dim_sem = ("parallel",)

    grid = (Bp // tb_eff,)
    out = pl.pallas_call(
        mlp_kernel,
        out_shape=jax.ShapeDtypeStruct((Bp, N_OUT_PAD), jnp.bfloat16),
        grid_spec=pltpu.PrefetchScalarGridSpec(
            num_scalar_prefetch=0,
            grid=grid,
            in_specs=[
                pl.BlockSpec((tb_eff, N_IN), lambda i: (i, 0)),      # x tiles stream (f32)
                pl.BlockSpec((N_IN, N_HID), lambda i: (0, 0)),       # W1 resident (bf16)
                pl.BlockSpec((1, N_HID), lambda i: (0, 0)),          # b1 resident
                pl.BlockSpec((N_HID, N_OUT_PAD), lambda i: (0, 0)),  # W2 resident
                pl.BlockSpec((1, N_OUT_PAD), lambda i: (0, 0)),      # b2 resident
            ],
            out_specs=pl.BlockSpec((tb_eff, N_OUT_PAD), lambda i: (i, 0)),
        ),
        compiler_params=pltpu.CompilerParams(
            dimension_semantics=dim_sem,
            # Big tiles + f32 x stream overshoot the default scoped-VMEM limit
            # (16 MiB v5e / 32 MiB v6e,v7x); 48 MiB is still under v7x's
            # 64 MiB physical VMEM.
            vmem_limit_bytes=48 * 1024 * 1024,
        ),
    )(x_p, w1_p, b1_p, w2_p, b2_p)

    return out[:B, :N_OUT].astype(jnp.float32)


def init_params(key):
    """Deterministic init matching nn.Linear shapes (weights stored transposed)."""
    k1, k2, k3, k4 = jax.random.split(key, 4)
    lim1 = 1.0 / jnp.sqrt(784.0)
    lim2 = 1.0 / jnp.sqrt(128.0)
    w1 = jax.random.uniform(k1, (784, 128), jnp.float32, -lim1, lim1)
    b1 = jax.random.uniform(k2, (128,), jnp.float32, -lim1, lim1)
    w2 = jax.random.uniform(k3, (128, 10), jnp.float32, -lim2, lim2)
    b2 = jax.random.uniform(k4, (10,), jnp.float32, -lim2, lim2)
    return w1, b1, w2, b2


def _reference(x, w1, b1, w2, b2):
    # Reference uses the same bf16 quantization of x/W1 as the kernel.
    x2d = x.reshape(-1, N_IN).astype(jnp.float32)
    x_bf = x2d.astype(jnp.bfloat16).astype(jnp.float32)
    w1_bf = w1.astype(jnp.bfloat16).astype(jnp.float32)
    h = jnp.maximum(x_bf @ w1_bf + b1.reshape(1, -1), 0.0)
    return jax.nn.softmax(h @ w2 + b2.reshape(1, -1), axis=1)


if __name__ == "__main__":
    key = jax.random.PRNGKey(0)
    kx, kx2, kp = jax.random.split(key, 3)

    w1, b1, w2, b2 = init_params(kp)
    params = prepare_params(w1, b1, w2, b2)   # weight pad/cast hoisted (once)

    # Small MNIST-like batch: NCHW (2, 1, 28, 28).
    x = jax.random.normal(kx, (2, 1, 28, 28), jnp.float32)
    out = jax.block_until_ready(simple_nn_forward(x, *params))
    ref = _reference(x, w1, b1, w2, b2)
    assert out.shape == (2, 10)
    assert jnp.allclose(out, ref, atol=2e-2, rtol=2e-2)
    assert jnp.allclose(jnp.sum(out, axis=1), 1.0, atol=2e-2)

    # Exercise multi-step grid + batch-tail padding (B=20, tb=16 -> grid=(2,)).
    x_big = jax.random.normal(kx2, (20, 1, 28, 28), jnp.float32)
    out_big = jax.block_until_ready(simple_nn_forward(x_big, *params, tb=16))
    ref_big = _reference(x_big, w1, b1, w2, b2)
    assert out_big.shape == (20, 10)
    assert jnp.allclose(out_big, ref_big, atol=2e-2, rtol=2e-2)
    assert jnp.allclose(jnp.sum(out_big, axis=1), 1.0, atol=2e-2)

    print("KERNEL_OK")
</pallas_src>

<mosaic_0001>
module attributes {stable_mosaic.version = 11 : i64} {
  func.func @mlp_kernel(%arg0: i32, %arg1: memref<16x784xf32, #tpu.memory_space<vmem>>, %arg2: memref<784x128xbf16, #tpu.memory_space<vmem>>, %arg3: memref<1x128xf32, #tpu.memory_space<vmem>>, %arg4: memref<128x128xf32, #tpu.memory_space<vmem>>, %arg5: memref<1x128xf32, #tpu.memory_space<vmem>>, %arg6: memref<16x128xbf16, #tpu.memory_space<vmem>>) attributes {dimension_semantics = [#tpu.dimension_semantics<parallel>], iteration_bounds = array<i64: 1>, scalar_prefetch = 0 : i64, scratch_operands = 0 : i64, tpu.core_type = #tpu.core_type<tc>, window_params = [{transform_indices = @transform_0, window_bounds = array<i64: 16, 784>}, {pipeline_mode = #tpu.pipeline_mode<synchronous>, transform_indices = @transform_1, window_bounds = array<i64: 784, 128>}, {pipeline_mode = #tpu.pipeline_mode<synchronous>, transform_indices = @transform_2, window_bounds = array<i64: 1, 128>}, {pipeline_mode = #tpu.pipeline_mode<synchronous>, transform_indices = @transform_3, window_bounds = array<i64: 128, 128>}, {pipeline_mode = #tpu.pipeline_mode<synchronous>, transform_indices = @transform_4, window_bounds = array<i64: 1, 128>}, {transform_indices = @transform_5, window_bounds = array<i64: 16, 128>}]} {
    %c0 = arith.constant 0 : index
    %c0_0 = arith.constant 0 : index
    %0 = vector.load %arg1[%c0, %c0_0] : memref<16x784xf32, #tpu.memory_space<vmem>>, vector<16x784xf32>
    %1 = arith.truncf %0 : vector<16x784xf32> to vector<16x784xbf16>
    %c0_1 = arith.constant 0 : index
    %c0_2 = arith.constant 0 : index
    %2 = vector.load %arg2[%c0_1, %c0_2] : memref<784x128xbf16, #tpu.memory_space<vmem>>, vector<784x128xbf16>
    %cst = arith.constant dense<0.000000e+00> : vector<16x128xf32>
    %3 = tpu.matmul %1, %2, %cst {dimension_numbers = #tpu.dot_dimension_numbers<[1], [0], [0], [1], [0, 0, 1, 1], [], []>} : vector<16x784xbf16>, vector<784x128xbf16>, vector<16x128xf32> -> vector<16x128xf32>
    %c0_3 = arith.constant 0 : index
    %c0_4 = arith.constant 0 : index
    %4 = vector.load %arg3[%c0_3, %c0_4] : memref<1x128xf32, #tpu.memory_space<vmem>>, vector<1x128xf32>
    %5 = vector.broadcast %4 : vector<1x128xf32> to vector<16x128xf32>
    %6 = arith.addf %3, %5 : vector<16x128xf32>
    %cst_5 = arith.constant 0.000000e+00 : f32
    %7 = vector.broadcast %cst_5 : f32 to vector<16x128xf32>
    %8 = arith.maximumf %6, %7 : vector<16x128xf32>
    %c0_6 = arith.constant 0 : index
    %c0_7 = arith.constant 0 : index
    %9 = vector.load %arg4[%c0_6, %c0_7] : memref<128x128xf32, #tpu.memory_space<vmem>>, vector<128x128xf32>
    %cst_8 = arith.constant dense<0.000000e+00> : vector<16x128xf32>
    %10 = tpu.matmul %8, %9, %cst_8 {dimension_numbers = #tpu.dot_dimension_numbers<[1], [0], [0], [1], [0, 0, 1, 1], [], []>} : vector<16x128xf32>, vector<128x128xf32>, vector<16x128xf32> -> vector<16x128xf32>
    %c0_9 = arith.constant 0 : index
    %c0_10 = arith.constant 0 : index
    %11 = vector.load %arg5[%c0_9, %c0_10] : memref<1x128xf32, #tpu.memory_space<vmem>>, vector<1x128xf32>
    %12 = vector.broadcast %11 : vector<1x128xf32> to vector<16x128xf32>
    %13 = arith.addf %10, %12 : vector<16x128xf32>
    %cst_11 = arith.constant dense<0xFF800000> : vector<16xf32>
    %14 = vector.multi_reduction <maximumf>, %13, %cst_11 [1] : vector<16x128xf32> to vector<16xf32>
    %15 = vector.shape_cast %14 : vector<16xf32> to vector<16x1xf32>
    %16 = vector.broadcast %15 : vector<16x1xf32> to vector<16x128xf32>
    %17 = arith.subf %13, %16 : vector<16x128xf32>
    %18 = math.exp %17 : vector<16x128xf32>
    %cst_12 = arith.constant dense<0.000000e+00> : vector<16xf32>
    %19 = vector.multi_reduction <add>, %18, %cst_12 [1] : vector<16x128xf32> to vector<16xf32>
    %20 = vector.shape_cast %19 : vector<16xf32> to vector<16x1xf32>
    %21 = tpu.reciprocal %20 {approx = true} : vector<16x1xf32> -> vector<16x1xf32>
    %22 = vector.broadcast %21 : vector<16x1xf32> to vector<16x128xf32>
    %23 = arith.mulf %18, %22 : vector<16x128xf32>
    %24 = arith.truncf %23 : vector<16x128xf32> to vector<16x128xbf16>
    %c0_13 = arith.constant 0 : index
    %c0_14 = arith.constant 0 : index
    %25 = vector.load %arg6[%c0_13, %c0_14] : memref<16x128xbf16, #tpu.memory_space<vmem>>, vector<16x128xbf16>
    tpu.vector_store %arg6[%c0_13, %c0_14], %24 {strides = array<i32>} : memref<16x128xbf16, #tpu.memory_space<vmem>>, vector<16x128xbf16>,
    return
  }
  func.func @transform_0(%arg0: i32) -> (i32, i32) {
    %c0_i32 = arith.constant 0 : i32
    %c0_i32_0 = arith.constant 0 : i32
    return %arg0, %c0_i32 : i32, i32
  }
  func.func @transform_1(%arg0: i32) -> (i32, i32) {
    %c0_i32 = arith.constant 0 : i32
    %c0_i32_0 = arith.constant 0 : i32
    %c0_i32_1 = arith.constant 0 : i32
    return %c0_i32, %c0_i32_0 : i32, i32
  }
  func.func @transform_2(%arg0: i32) -> (i32, i32) {
    %c0_i32 = arith.constant 0 : i32
    %c0_i32_0 = arith.constant 0 : i32
    %c0_i32_1 = arith.constant 0 : i32
    return %c0_i32, %c0_i32_0 : i32, i32
  }
  func.func @transform_3(%arg0: i32) -> (i32, i32) {
    %c0_i32 = arith.constant 0 : i32
    %c0_i32_0 = arith.constant 0 : i32
    %c0_i32_1 = arith.constant 0 : i32
    return %c0_i32, %c0_i32_0 : i32, i32
  }
  func.func @transform_4(%arg0: i32) -> (i32, i32) {
    %c0_i32 = arith.constant 0 : i32
    %c0_i32_0 = arith.constant 0 : i32
    %c0_i32_1 = arith.constant 0 : i32
    return %c0_i32, %c0_i32_0 : i32, i32
  }
  func.func @transform_5(%arg0: i32) -> (i32, i32) {
    %c0_i32 = arith.constant 0 : i32
    %c0_i32_0 = arith.constant 0 : i32
    return %arg0, %c0_i32 : i32, i32
  }
}

</mosaic_0001>

<llo_original>
// kernel: simple_nn_forward.1
$region0: #{simple_nn_forward.1}
  #allocation0 [shape = 'u32[]', space=smem, size = 0x4, offset = 0x4, fixed_abs, tag = 'smem constant byte address 0x4 - core index']
  #allocation1 [shape = 'u32[144,128]{1,0:T(1,128)}', space=vmem, size = 0x12000, scoped, tag = 'internal scratch']
  %s0 = inlined_call_operand.vmem [shape: f32[16,784], index: 0, kind: input, shape index: {}]
  %s1 = inlined_call_operand.hbm [shape: bf16[784,128], index: 1, kind: input, shape index: {}]
  %s2 = inlined_call_operand.vmem [shape: f32[1,128], index: 2, kind: input, shape index: {}]
  %s3 = inlined_call_operand.vmem [shape: f32[128,128], index: 3, kind: input, shape index: {}]
  %s4 = inlined_call_operand.vmem [shape: f32[1,128], index: 4, kind: input, shape index: {}]
  %s5 = inlined_call_operand.vmem [shape: bf16[16,128], index: 5, kind: output, shape index: {}]
  %s6 = sld [smem:[#allocation0]]
  $region34: #{simple_nn_forward.1} parent=0
    _
  %s8 = ssub.s32 1, %s6
  %s9 = scalar_select 0, %s8, %s6
  $region1: #{simple_nn_forward.1} parent=0
    #allocation2 [shape = 'u8[200704]{0}', space=vmem, size = 0x31000, scoped, tag = 'input window, operand 1, single buffered']
    #allocation3 [shape = 's32[1]{0}', space=sflag, size = 0x4, scoped, tag = 'scoped memory for simple_nn_forward.1']
    %10 = vsyncpa [#allocation3], 0
    // Predicated region
    $region2: #{simple_nn_forward.1} parent=1 // pred_check
      _
    $region3: #{simple_nn_forward.1} parent=1 // pred_check_branch
      %12 = sbr.rel (0) target = $region5
    $region4: #{simple_nn_forward.1} parent=1 // pred_region
      _
    $region5: #{simple_nn_forward.1} parent=1 // pred_fallthru
      _
    // Predicated region
    $region6: #{simple_nn_forward.1} parent=1 // pred_check
      _
    $region7: #{simple_nn_forward.1} parent=1 // pred_check_branch
      %14 = sbr.rel (0) target = $region9
    $region8: #{simple_nn_forward.1} parent=1 // pred_region
      %s16 = ssub.s32 6272, 6272
      %17 = vsyncadd [#allocation3], %s16
      %s18 = sshll.u32 [#allocation2], 4
      %s19 = int_to_ptr.vmem [resolvable:$true] %s18
      %24 = dma.hbm_to_vmem [thread:$0]  %s1, 6272, %s19, [#allocation3], 64, 64, 4
    $region9: #{simple_nn_forward.1} parent=1 // pred_fallthru
      _
    // Predicated region
    $region10: #{simple_nn_forward.1} parent=1 // pred_check
      _
    $region11: #{simple_nn_forward.1} parent=1 // pred_check_branch
      %26 = sbr.rel (0) target = $region13
    $region12: #{simple_nn_forward.1} parent=1 // pred_region
      _
    $region13: #{simple_nn_forward.1} parent=1 // pred_fallthru
      _
    // Predicated region
    $region14: #{simple_nn_forward.1} parent=1 // pred_check
      _
    $region15: #{simple_nn_forward.1} parent=1 // pred_check_branch
      %28 = sbr.rel (0) target = $region17
    $region16: #{simple_nn_forward.1} parent=1 // pred_region
      _
    $region17: #{simple_nn_forward.1} parent=1 // pred_fallthru
      _
    // Predicated region
    $region18: #{simple_nn_forward.1} parent=1 // pred_check
      _
    $region19: #{simple_nn_forward.1} parent=1 // pred_check_branch
      %30 = sbr.rel (0) target = $region21
    $region20: #{simple_nn_forward.1} parent=1 // pred_region
      _
    $region21: #{simple_nn_forward.1} parent=1 // pred_fallthru
      _
    // Predicated region
    $region22: #{simple_nn_forward.1} parent=1 // pred_check
      _
    $region23: #{simple_nn_forward.1} parent=1 // pred_check_branch
      %32 = sbr.rel (0) target = $region25
    $region24: #{simple_nn_forward.1} parent=1 // pred_region
      %33 = dma.done [#allocation3], 6272
    $region25: #{simple_nn_forward.1} parent=1 // pred_fallthru
      _
    %v35 = vld [vmem:[%s0] sm:$0xff]
    %v36 = vld [vmem:[%s0 + $0x8] sm:$0xff]
    %v37 = vld [vmem:[%s0 + $0x10] sm:$0xff]
    %v38 = vld [vmem:[%s0 + $0x18] sm:$0xff]
    %v39 = vld [vmem:[%s0 + $0x20] sm:$0xff]
    %v40 = vld [vmem:[%s0 + $0x28] sm:$0xff]
    %v41 = vld [vmem:[%s0 + $0x30] sm:$0xff]
    %v42 = vld [vmem:[%s0 + $0x38] sm:$0xff]
    %v43 = vld [vmem:[%s0 + $0x40] sm:$0xff]
    %v44 = vld [vmem:[%s0 + $0x48] sm:$0xff]
    %v45 = vld [vmem:[%s0 + $0x50] sm:$0xff]
    %v46 = vld [vmem:[%s0 + $0x58] sm:$0xff]
    %v47 = vld [vmem:[%s0 + $0x60] sm:$0xff]
    %v48 = vld [vmem:[%s0 + $0x68] sm:$0xff]
    %v49 = vpack.c.bf16 %v42, %v35
    %v50 = vpack.c.bf16 %v43, %v36
    %v51 = vpack.c.bf16 %v44, %v37
    %v52 = vpack.c.bf16 %v45, %v38
    %v53 = vpack.c.bf16 %v46, %v39
    %v54 = vpack.c.bf16 %v47, %v40
    %v55 = vpack.c.bf16 %v48, %v41
    %v56 = vld [vmem:[#allocation2] sm:$0xf]
    %v57 = vld [vmem:[#allocation2 + $0x4] sm:$0xf]
    %v58 = vld [vmem:[#allocation2 + $0x8] sm:$0xf]
    %v59 = vld [vmem:[#allocation2 + $0xc] sm:$0xf]
    %v60 = vld [vmem:[#allocation2 + $0x10] sm:$0xf]
    %v61 = vld [vmem:[#allocation2 + $0x14] sm:$0xf]
    %v62 = vld [vmem:[#allocation2 + $0x18] sm:$0xf]
    %v63 = vld [vmem:[#allocation2 + $0x1c] sm:$0xf]
    %v64 = vld [vmem:[#allocation2 + $0x20] sm:$0xf]
    %v65 = vld [vmem:[#allocation2 + $0x24] sm:$0xf]
    %v66 = vld [vmem:[#allocation2 + $0x28] sm:$0xf]
    %v67 = vld [vmem:[#allocation2 + $0x2c] sm:$0xf]
    %v68 = vld [vmem:[#allocation2 + $0x30] sm:$0xf]
    %v69 = vld [vmem:[#allocation2 + $0x34] sm:$0xf]
    %v70 = vld [vmem:[#allocation2 + $0x38] sm:$0xf]
    %v71 = vld [vmem:[#allocation2 + $0x3c] sm:$0xf]
    %v72 = vld [vmem:[#allocation2 + $0x40] sm:$0xf]
    %v73 = vld [vmem:[#allocation2 + $0x44] sm:$0xf]
    %v74 = vld [vmem:[#allocation2 + $0x48] sm:$0xf]
    %v75 = vld [vmem:[#allocation2 + $0x4c] sm:$0xf]
    %v76 = vld [vmem:[#allocation2 + $0x50] sm:$0xf]
    %v77 = vld [vmem:[#allocation2 + $0x54] sm:$0xf]
    %v78 = vld [vmem:[#allocation2 + $0x58] sm:$0xf]
    %v79 = vld [vmem:[#allocation2 + $0x5c] sm:$0xf]
    %v80 = vld [vmem:[#allocation2 + $0x60] sm:$0xf]
    %v81 = vld [vmem:[#allocation2 + $0x64] sm:$0xf]
    %v82 = vld [vmem:[#allocation2 + $0x68] sm:$0xf]
    %v83 = vld [vmem:[#allocation2 + $0x6c] sm:$0xf]
    %v84 = vld [vmem:[#allocation2 + $0x70] sm:$0xf]
    %v85 = vld [vmem:[#allocation2 + $0x74] sm:$0xf]
    %v86 = vld [vmem:[#allocation2 + $0x78] sm:$0xf]
    %v87 = vld [vmem:[#allocation2 + $0x7c] sm:$0xf]
    %v88 = vld [vmem:[#allocation2 + $0x80] sm:$0xf]
    %v89 = vld [vmem:[#allocation2 + $0x84] sm:$0xf]
    %v90 = vld [vmem:[#allocation2 + $0x88] sm:$0xf]
    %v91 = vld [vmem:[#allocation2 + $0x8c] sm:$0xf]
    %v92 = vld [vmem:[#allocation2 + $0x90] sm:$0xf]
    %v93 = vld [vmem:[#allocation2 + $0x94] sm:$0xf]
    %v94 = vld [vmem:[#allocation2 + $0x98] sm:$0xf]
    %v95 = vld [vmem:[#allocation2 + $0x9c] sm:$0xf]
    %v96 = vld [vmem:[#allocation2 + $0xa0] sm:$0xf]
    %v97 = vld [vmem:[#allocation2 + $0xa4] sm:$0xf]
    %v98 = vld [vmem:[#allocation2 + $0xa8] sm:$0xf]
    %v99 = vld [vmem:[#allocation2 + $0xac] sm:$0xf]
    %v100 = vld [vmem:[#allocation2 + $0xb0] sm:$0xf]
    %v101 = vld [vmem:[#allocation2 + $0xb4] sm:$0xf]
    %v102 = vld [vmem:[#allocation2 + $0xb8] sm:$0xf]
    %v103 = vld [vmem:[#allocation2 + $0xbc] sm:$0xf]
    %v104 = vld [vmem:[#allocation2 + $0xc0] sm:$0xf]
    %v105 = vld [vmem:[#allocation2 + $0xc4] sm:$0xf]
    %v106 = vld [vmem:[#allocation2 + $0xc8] sm:$0xf]
    %v107 = vld [vmem:[#allocation2 + $0xcc] sm:$0xf]
    %v108 = vld [vmem:[#allocation2 + $0xd0] sm:$0xf]
    %v109 = vld [vmem:[#allocation2 + $0xd4] sm:$0xf]
    %v110 = vld [vmem:[#allocation2 + $0xd8] sm:$0xf]
    %v111 = vld [vmem:[#allocation2 + $0xdc] sm:$0xf]
    %v112 = vld [vmem:[#allocation2 + $0xe0] sm:$0xf]
    %v113 = vld [vmem:[#allocation2 + $0xe4] sm:$0xf]
    %v114 = vld [vmem:[#allocation2 + $0xe8] sm:$0xf]
    %v115 = vld [vmem:[#allocation2 + $0xec] sm:$0xf]
    %v116 = vld [vmem:[#allocation2 + $0xf0] sm:$0xf]
    %v117 = vld [vmem:[#allocation2 + $0xf4] sm:$0xf]
    %v118 = vld [vmem:[#allocation2 + $0xf8] sm:$0xf]
    %v119 = vld [vmem:[#allocation2 + $0xfc] sm:$0xf]
    %v120 = vld [vmem:[#allocation2 + $0x100] sm:$0xf]
    %v121 = vld [vmem:[#allocation2 + $0x104] sm:$0xf]
    %v122 = vld [vmem:[#allocation2 + $0x108] sm:$0xf]
    %v123 = vld [vmem:[#allocation2 + $0x10c] sm:$0xf]
    %v124 = vld [vmem:[#allocation2 + $0x110] sm:$0xf]
    %v125 = vld [vmem:[#allocation2 + $0x114] sm:$0xf]
    %v126 = vld [vmem:[#allocation2 + $0x118] sm:$0xf]
    %v127 = vld [vmem:[#allocation2 + $0x11c] sm:$0xf]
    %v128 = vld [vmem:[#allocation2 + $0x120] sm:$0xf]
    %v129 = vld [vmem:[#allocation2 + $0x124] sm:$0xf]
    %v130 = vld [vmem:[#allocation2 + $0x128] sm:$0xf]
    %v131 = vld [vmem:[#allocation2 + $0x12c] sm:$0xf]
    %v132 = vld [vmem:[#allocation2 + $0x130] sm:$0xf]
    %v133 = vld [vmem:[#allocation2 + $0x134] sm:$0xf]
    %v134 = vld [vmem:[#allocation2 + $0x138] sm:$0xf]
    %v135 = vld [vmem:[#allocation2 + $0x13c] sm:$0xf]
    %v136 = vld [vmem:[#allocation2 + $0x140] sm:$0xf]
    %v137 = vld [vmem:[#allocation2 + $0x144] sm:$0xf]
    %v138 = vld [vmem:[#allocation2 + $0x148] sm:$0xf]
    %v139 = vld [vmem:[#allocation2 + $0x14c] sm:$0xf]
    %v140 = vld [vmem:[#allocation2 + $0x150] sm:$0xf]
    %v141 = vld [vmem:[#allocation2 + $0x154] sm:$0xf]
    %v142 = vld [vmem:[#allocation2 + $0x158] sm:$0xf]
    %v143 = vld [vmem:[#allocation2 + $0x15c] sm:$0xf]
    %v144 = vld [vmem:[#allocation2 + $0x160] sm:$0xf]
    %v145 = vld [vmem:[#allocation2 + $0x164] sm:$0xf]
    %v146 = vld [vmem:[#allocation2 + $0x168] sm:$0xf]
    %v147 = vld [vmem:[#allocation2 + $0x16c] sm:$0xf]
    %v148 = vld [vmem:[#allocation2 + $0x170] sm:$0xf]
    %v149 = vld [vmem:[#allocation2 + $0x174] sm:$0xf]
    %v150 = vld [vmem:[#allocation2 + $0x178] sm:$0xf]
    %v151 = vld [vmem:[#allocation2 + $0x17c] sm:$0xf]
    %v152 = vld [vmem:[#allocation2 + $0x180] sm:$0xf]
    %v153 = vld [vmem:[#allocation2 + $0x184] sm:$0xf]
    %v154 = vld [vmem:[%s2] sm:$0x1]
    %v156 = vlaneseq
    %v157 = vshrl.u32 %v156, 7
    %v158 = vsub.s32 0, %v157
    %v159 = vrot.slane %v154, %v158
    %v259 = vunpack.c.l.b16 %v56
    %v260 = vunpack.c.l.b16 %v57
    %v261 = vunpack.c.l.b16 %v58
    %v262 = vunpack.c.l.b16 %v59
    %v263 = vunpack.c.l.b16 %v60
    %v264 = vunpack.c.l.b16 %v61
    %v265 = vunpack.c.l.b16 %v62
    %v266 = vunpack.c.l.b16 %v63
    %v267 = vunpack.c.l.b16 %v64
    %v268 = vunpack.c.l.b16 %v65
    %v269 = vunpack.c.l.b16 %v66
    %v270 = vunpack.c.l.b16 %v67
    %v271 = vunpack.c.l.b16 %v68
    %v272 = vunpack.c.l.b16 %v69
    %v273 = vunpack.c.l.b16 %v70
    %v274 = vunpack.c.l.b16 %v71
    %v275 = vunpack.c.l.b16 %v72
    %v276 = vunpack.c.l.b16 %v73
    %v277 = vunpack.c.l.b16 %v74
    %v278 = vunpack.c.l.b16 %v75
    %v279 = vunpack.c.l.b16 %v76
    %v280 = vunpack.c.l.b16 %v77
    %v281 = vunpack.c.l.b16 %v78
    %v282 = vunpack.c.l.b16 %v79
    %v283 = vunpack.c.l.b16 %v80
    %v284 = vunpack.c.l.b16 %v81
    %v285 = vunpack.c.l.b16 %v82
    %v286 = vunpack.c.l.b16 %v83
    %v287 = vunpack.c.l.b16 %v84
    %v288 = vunpack.c.l.b16 %v85
    %v289 = vunpack.c.l.b16 %v86
    %v290 = vunpack.c.l.b16 %v87
    %v291 = vunpack.c.l.b16 %v88
    %v292 = vunpack.c.l.b16 %v89
    %v293 = vunpack.c.l.b16 %v90
    %v294 = vunpack.c.l.b16 %v91
    %v295 = vunpack.c.l.b16 %v92
    %v296 = vunpack.c.l.b16 %v93
    %v297 = vunpack.c.l.b16 %v94
    %v298 = vunpack.c.l.b16 %v95
    %v299 = vunpack.c.l.b16 %v96
    %v300 = vunpack.c.l.b16 %v97
    %v301 = vunpack.c.l.b16 %v98
    %v302 = vunpack.c.l.b16 %v99
    %v303 = vunpack.c.l.b16 %v100
    %v304 = vunpack.c.l.b16 %v101
    %v305 = vunpack.c.l.b16 %v102
    %v306 = vunpack.c.l.b16 %v103
    %v307 = vunpack.c.l.b16 %v104
    %v308 = vunpack.c.l.b16 %v105
    %v309 = vunpack.c.l.b16 %v106
    %v310 = vunpack.c.l.b16 %v107
    %v311 = vunpack.c.l.b16 %v108
    %v312 = vunpack.c.l.b16 %v109
    %v313 = vunpack.c.l.b16 %v110
    %v314 = vunpack.c.l.b16 %v111
    %v315 = vunpack.c.l.b16 %v112
    %v316 = vunpack.c.l.b16 %v113
    %v317 = vunpack.c.l.b16 %v114
    %v318 = vunpack.c.l.b16 %v115
    %v319 = vunpack.c.l.b16 %v116
    %v320 = vunpack.c.l.b16 %v117
    %v321 = vunpack.c.l.b16 %v118
    %v322 = vunpack.c.l.b16 %v119
    %v323 = vunpack.c.l.b16 %v120
    %v324 = vunpack.c.l.b16 %v121
    %v325 = vunpack.c.l.b16 %v122
    %v326 = vunpack.c.l.b16 %v123
    %v327 = vunpack.c.l.b16 %v124
    %v328 = vunpack.c.l.b16 %v125
    %v329 = vunpack.c.l.b16 %v126
    %v330 = vunpack.c.l.b16 %v127
    %v331 = vunpack.c.l.b16 %v128
    %v332 = vunpack.c.l.b16 %v129
    %v333 = vunpack.c.l.b16 %v130
    %v334 = vunpack.c.l.b16 %v131
    %v335 = vunpack.c.l.b16 %v132
    %v336 = vunpack.c.l.b16 %v133
    %v337 = vunpack.c.l.b16 %v134
    %v338 = vunpack.c.l.b16 %v135
    %v339 = vunpack.c.l.b16 %v136
    %v340 = vunpack.c.l.b16 %v137
    %v341 = vunpack.c.l.b16 %v138
    %v342 = vunpack.c.l.b16 %v139
    %v343 = vunpack.c.l.b16 %v140
    %v344 = vunpack.c.l.b16 %v141
    %v345 = vunpack.c.l.b16 %v142
    %v346 = vunpack.c.l.b16 %v143
    %v347 = vunpack.c.l.b16 %v144
    %v348 = vunpack.c.l.b16 %v145
    %v349 = vunpack.c.l.b16 %v146
    %v350 = vunpack.c.l.b16 %v147
    %v351 = vunpack.c.l.b16 %v148
    %v352 = vunpack.c.l.b16 %v149
    %v353 = vunpack.c.l.b16 %v150
    %v354 = vunpack.c.l.b16 %v151
    %v355 = vunpack.c.l.b16 %v152
    %v356 = vunpack.c.l.b16 %v153
    %v357 = vpack.c.b16 %v260, %v259
    %v358 = vpack.c.b16 %v262, %v261
    %v359 = vpack.c.b16 %v264, %v263
    %v360 = vpack.c.b16 %v266, %v265
    %v361 = vpack.c.b16 %v268, %v267
    %v362 = vpack.c.b16 %v270, %v269
    %v363 = vpack.c.b16 %v272, %v271
    %v364 = vpack.c.b16 %v274, %v273
    %v365 = vpack.c.b16 %v276, %v275
    %v366 = vpack.c.b16 %v278, %v277
    %v367 = vpack.c.b16 %v280, %v279
    %v368 = vpack.c.b16 %v282, %v281
    %v369 = vpack.c.b16 %v284, %v283
    %v370 = vpack.c.b16 %v286, %v285
    %v371 = vpack.c.b16 %v288, %v287
    %v372 = vpack.c.b16 %v290, %v289
    %v373 = vpack.c.b16 %v292, %v291
    %v374 = vpack.c.b16 %v294, %v293
    %v375 = vpack.c.b16 %v296, %v295
    %v376 = vpack.c.b16 %v298, %v297
    %v377 = vpack.c.b16 %v300, %v299
    %v378 = vpack.c.b16 %v302, %v301
    %v379 = vpack.c.b16 %v304, %v303
    %v380 = vpack.c.b16 %v306, %v305
    %v381 = vpack.c.b16 %v308, %v307
    %v382 = vpack.c.b16 %v310, %v309
    %v383 = vpack.c.b16 %v312, %v311
    %v384 = vpack.c.b16 %v314, %v313
    %v385 = vpack.c.b16 %v316, %v315
    %v386 = vpack.c.b16 %v318, %v317
    %v387 = vpack.c.b16 %v320, %v319
    %v388 = vpack.c.b16 %v322, %v321
    %v389 = vpack.c.b16 %v324, %v323
    %v390 = vpack.c.b16 %v326, %v325
    %v391 = vpack.c.b16 %v328, %v327
    %v392 = vpack.c.b16 %v330, %v329
    %v393 = vpack.c.b16 %v332, %v331
    %v394 = vpack.c.b16 %v334, %v333
    %v395 = vpack.c.b16 %v336, %v335
    %v396 = vpack.c.b16 %v338, %v337
    %v397 = vpack.c.b16 %v340, %v339
    %v398 = vpack.c.b16 %v342, %v341
    %v399 = vpack.c.b16 %v344, %v343
    %v400 = vpack.c.b16 %v346, %v345
    %v401 = vpack.c.b16 %v348, %v347
    %v402 = vpack.c.b16 %v350, %v349
    %v403 = vpack.c.b16 %v352, %v351
    %v404 = vpack.c.b16 %v354, %v353
    %v405 = vpack.c.b16 %v356, %v355
    %vm455 = vcmask 130048
    %v457 = vsel %vm455, %v55, 0
    %459 = vmatprep.subr.bf16.mxu0 0
    %460 = vmatpush1.bf16.msra.mxu0 %v364
    %461 = vmatprep.subr.bf16.mxu0 0
    %462 = vmatpush1.bf16.msra.mxu0 %v363
    %463 = vmatprep.subr.bf16.mxu0 0
    %464 = vmatpush1.bf16.msra.mxu0 %v362
    %465 = vmatprep.subr.bf16.mxu0 0
    %466 = vmatpush1.bf16.msra.mxu0 %v361
    %467 = vmatprep.subr.bf16.mxu0 0
    %468 = vmatpush1.bf16.msra.mxu0 %v360
    %469 = vmatprep.subr.bf16.mxu0 0
    %470 = vmatpush1.bf16.msra.mxu0 %v359
    %471 = vmatprep.subr.bf16.mxu0 0
    %472 = vmatpush1.bf16.msra.mxu0 %v358
    %473 = vmatprep.subr.bf16.mxu0 0
    %474 = vmatpush1.bf16.msra.mxu0 %v357
    %475 = vmatprep.subr.bf16.mxu0 0
    %476 = vmatpush2.bf16.msra.mxu0 %v372
    %477 = vmatprep.subr.bf16.mxu0 0
    %478 = vmatpush2.bf16.msra.mxu0 %v371
    %479 = vmatprep.subr.bf16.mxu0 0
    %480 = vmatpush2.bf16.msra.mxu0 %v370
    %481 = vmatprep.subr.bf16.mxu0 0
    %482 = vmatpush2.bf16.msra.mxu0 %v369
    %483 = vmatprep.subr.bf16.mxu0 0
    %484 = vmatpush2.bf16.msra.mxu0 %v368
    %485 = vmatprep.subr.bf16.mxu0 0
    %486 = vmatpush2.bf16.msra.mxu0 %v367
    %487 = vmatprep.subr.bf16.mxu0 0
    %488 = vmatpush2.bf16.msra.mxu0 %v366
    %489 = vmatprep.subr.bf16.mxu0 0
    %490 = vmatpush2.bf16.msra.mxu0 %v365
    %491 = vmatprep.mubr.bf16.mxu0 %v50
    %492 = vmatmul.mubr.bf16.gmra.mxu0 %v49
    %v493 = vpop.f32.mrf.mxu0
    %v494 = vadd.f32 %v159, %v493
    %v495 = vpop.f32.mrf.mxu0
    %v496 = vpop.f32.mrf.mxu0
    %v497 = vadd.f32 %v159, %v496
    %v498 = vpop.f32.mrf.mxu0
    %499 = vdwg.mxu0
    %500 = vmatprep.subr.bf16.mxu0 0
    %501 = vmatpush1.bf16.msra.mxu0 %v380
    %502 = vmatprep.subr.bf16.mxu0 0
    %503 = vmatpush1.bf16.msra.mxu0 %v379
    %504 = vmatprep.subr.bf16.mxu0 0
    %505 = vmatpush1.bf16.msra.mxu0 %v378
    %506 = vmatprep.subr.bf16.mxu0 0
    %507 = vmatpush1.bf16.msra.mxu0 %v377
    %508 = vmatprep.subr.bf16.mxu0 0
    %509 = vmatpush1.bf16.msra.mxu0 %v376
    %510 = vmatprep.subr.bf16.mxu0 0
    %511 = vmatpush1.bf16.msra.mxu0 %v375
    %512 = vmatprep.subr.bf16.mxu0 0
    %513 = vmatpush1.bf16.msra.mxu0 %v374
    %514 = vmatprep.subr.bf16.mxu0 0
    %515 = vmatpush1.bf16.msra.mxu0 %v373
    %516 = vmatprep.subr.bf16.mxu0 0
    %517 = vmatpush2.bf16.msra.mxu0 %v388
    %518 = vmatprep.subr.bf16.mxu0 0
    %519 = vmatpush2.bf16.msra.mxu0 %v387
    %520 = vmatprep.subr.bf16.mxu0 0
    %521 = vmatpush2.bf16.msra.mxu0 %v386
    %522 = vmatprep.subr.bf16.mxu0 0
    %523 = vmatpush2.bf16.msra.mxu0 %v385
    %524 = vmatprep.subr.bf16.mxu0 0
    %525 = vmatpush2.bf16.msra.mxu0 %v384
    %526 = vmatprep.subr.bf16.mxu0 0
    %527 = vmatpush2.bf16.msra.mxu0 %v383
    %528 = vmatprep.subr.bf16.mxu0 0
    %529 = vmatpush2.bf16.msra.mxu0 %v382
    %530 = vmatprep.subr.bf16.mxu0 0
    %531 = vmatpush2.bf16.msra.mxu0 %v381
    %532 = vmatprep.mubr.bf16.mxu0 %v52
    %533 = vmatmul.mubr.bf16.gmra.mxu0 %v51
    %v534 = vpop.f32.mrf.mxu0
    %v535 = vadd.f32 %v494, %v534
    %v536 = vpop.f32.mrf.mxu0
    %v537 = vpop.f32.mrf.mxu0
    %v538 = vadd.f32 %v497, %v537
    %v539 = vpop.f32.mrf.mxu0
    %540 = vdwg.mxu0
    %541 = vmatprep.subr.bf16.mxu0 0
    %542 = vmatpush1.bf16.msra.mxu0 %v396
    %543 = vmatprep.subr.bf16.mxu0 0
    %544 = vmatpush1.bf16.msra.mxu0 %v395
    %545 = vmatprep.subr.bf16.mxu0 0
    %546 = vmatpush1.bf16.msra.mxu0 %v394
    %547 = vmatprep.subr.bf16.mxu0 0
    %548 = vmatpush1.bf16.msra.mxu0 %v393
    %549 = vmatprep.subr.bf16.mxu0 0
    %550 = vmatpush1.bf16.msra.mxu0 %v392
    %551 = vmatprep.subr.bf16.mxu0 0
    %552 = vmatpush1.bf16.msra.mxu0 %v391
    %553 = vmatprep.subr.bf16.mxu0 0
    %554 = vmatpush1.bf16.msra.mxu0 %v390
    %555 = vmatprep.subr.bf16.mxu0 0
    %556 = vmatpush1.bf16.msra.mxu0 %v389
    %557 = vmatprep.subr.bf16.mxu0 0
    %558 = vmatpush2.bf16.msra.mxu0 %v404
    %559 = vmatprep.subr.bf16.mxu0 0
    %560 = vmatpush2.bf16.msra.mxu0 %v403
    %561 = vmatprep.subr.bf16.mxu0 0
    %562 = vmatpush2.bf16.msra.mxu0 %v402
    %563 = vmatprep.subr.bf16.mxu0 0
    %564 = vmatpush2.bf16.msra.mxu0 %v401
    %565 = vmatprep.subr.bf16.mxu0 0
    %566 = vmatpush2.bf16.msra.mxu0 %v400
    %567 = vmatprep.subr.bf16.mxu0 0
    %568 = vmatpush2.bf16.msra.mxu0 %v399
    %569 = vmatprep.subr.bf16.mxu0 0
    %570 = vmatpush2.bf16.msra.mxu0 %v398
    %571 = vmatprep.subr.bf16.mxu0 0
    %572 = vmatpush2.bf16.msra.mxu0 %v397
    %573 = vmatprep.mubr.bf16.mxu0 %v54
    %574 = vmatmul.mubr.bf16.gmra.mxu0 %v53
    %v575 = vpop.f32.mrf.mxu0
    %v576 = vadd.f32 %v535, %v575
    %v577 = vpop.f32.mrf.mxu0
    %v578 = vpop.f32.mrf.mxu0
    %v579 = vadd.f32 %v538, %v578
    %v580 = vpop.f32.mrf.mxu0
    %581 = vdwg.mxu0
    %582 = vmatprep.subr.bf16.mxu0 0
    %583 = vmatpush1.bf16.msra.mxu0 0
    %584 = vmatprep.subr.bf16.mxu0 0
    %585 = vmatpush1.bf16.msra.mxu0 0
    %586 = vmatprep.subr.bf16.mxu0 0
    %587 = vmatpush1.bf16.msra.mxu0 0
    %588 = vmatprep.subr.bf16.mxu0 0
    %589 = vmatpush1.bf16.msra.mxu0 0
    %590 = vmatprep.subr.bf16.mxu0 0
    %591 = vmatpush1.bf16.msra.mxu0 0
    %592 = vmatprep.subr.bf16.mxu0 0
    %593 = vmatpush1.bf16.msra.mxu0 0
    %594 = vmatprep.subr.bf16.mxu0 0
    %595 = vmatpush1.bf16.msra.mxu0 0
    %596 = vmatprep.subr.bf16.mxu0 0
    %597 = vmatpush1.bf16.msra.mxu0 %v405
    %598 = vmatprep.subr.bf16.mxu0 0
    %599 = vmatpush2.bf16.msra.mxu0 0
    %600 = vmatprep.subr.bf16.mxu0 0
    %601 = vmatpush2.bf16.msra.mxu0 0
    %602 = vmatprep.subr.bf16.mxu0 0
    %603 = vmatpush2.bf16.msra.mxu0 0
    %604 = vmatprep.subr.bf16.mxu0 0
    %605 = vmatpush2.bf16.msra.mxu0 0
    %606 = vmatprep.subr.bf16.mxu0 0
    %607 = vmatpush2.bf16.msra.mxu0 0
    %608 = vmatprep.subr.bf16.mxu0 0
    %609 = vmatpush2.bf16.msra.mxu0 0
    %610 = vmatprep.subr.bf16.mxu0 0
    %611 = vmatpush2.bf16.msra.mxu0 0
    %612 = vmatprep.subr.bf16.mxu0 0
    %613 = vmatpush2.bf16.msra.mxu0 0
    %614 = vmatprep.mubr.bf16.mxu0 0
    %615 = vmatmul.mubr.bf16.gmra.mxu0 %v457
    %v616 = vpop.f32.mrf.mxu0
    %v617 = vadd.f32 %v576, %v616
    %v618 = vpop.f32.mrf.mxu0
    %v619 = vpop.f32.mrf.mxu0
    %v620 = vadd.f32 %v579, %v619
    %v621 = vpop.f32.mrf.mxu0
    %622 = vdwg.mxu0
    %v623 = vmax.f32 %v617, 0.0
    %v624 = vmax.f32 %v620, 0.0
    %v625 = vld [vmem:[%s3] sm:$0xff]
    %v626 = vld [vmem:[%s3 + $0x8] sm:$0xff]
    %v627 = vld [vmem:[%s3 + $0x10] sm:$0xff]
    %v628 = vld [vmem:[%s3 + $0x18] sm:$0xff]
    %v629 = vld [vmem:[%s3 + $0x20] sm:$0xff]
    %v630 = vld [vmem:[%s3 + $0x28] sm:$0xff]
    %v631 = vld [vmem:[%s3 + $0x30] sm:$0xff]
    %v632 = vld [vmem:[%s3 + $0x38] sm:$0xff]
    %v633 = vld [vmem:[%s3 + $0x40] sm:$0xff]
    %v634 = vld [vmem:[%s3 + $0x48] sm:$0xff]
    %v635 = vld [vmem:[%s3 + $0x50] sm:$0xff]
    %v636 = vld [vmem:[%s3 + $0x58] sm:$0xff]
    %v637 = vld [vmem:[%s3 + $0x60] sm:$0xff]
    %v638 = vld [vmem:[%s3 + $0x68] sm:$0xff]
    %v639 = vld [vmem:[%s3 + $0x70] sm:$0xff]
    %v640 = vld [vmem:[%s3 + $0x78] sm:$0xff]
    %v641 = vld [vmem:[%s4] sm:$0x1]
    %v643 = vlaneseq
    %v644 = vshrl.u32 %v643, 7
    %v645 = vsub.s32 0, %v644
    %v646 = vrot.slane %v641, %v645
    %648 = vmatprep.subr.mxu0 0.0
    %649 = vmatpush1.msra.mxu0 %v640
    %650 = vmatprep.subr.mxu0 0.0
    %651 = vmatpush1.msra.mxu0 %v639
    %652 = vmatprep.subr.mxu0 0.0
    %653 = vmatpush1.msra.mxu0 %v638
    %654 = vmatprep.subr.mxu0 0.0
    %655 = vmatpush1.msra.mxu0 %v637
    %656 = vmatprep.subr.mxu0 0.0
    %657 = vmatpush1.msra.mxu0 %v636
    %658 = vmatprep.subr.mxu0 0.0
    %659 = vmatpush1.msra.mxu0 %v635
    %660 = vmatprep.subr.mxu0 0.0
    %661 = vmatpush1.msra.mxu0 %v634
    %662 = vmatprep.subr.mxu0 0.0
    %663 = vmatpush1.msra.mxu0 %v633
    %664 = vmatprep.subr.mxu0 0.0
    %665 = vmatpush1.msra.mxu0 %v632
    %666 = vmatprep.subr.mxu0 0.0
    %667 = vmatpush1.msra.mxu0 %v631
    %668 = vmatprep.subr.mxu0 0.0
    %669 = vmatpush1.msra.mxu0 %v630
    %670 = vmatprep.subr.mxu0 0.0
    %671 = vmatpush1.msra.mxu0 %v629
    %672 = vmatprep.subr.mxu0 0.0
    %673 = vmatpush1.msra.mxu0 %v628
    %674 = vmatprep.subr.mxu0 0.0
    %675 = vmatpush1.msra.mxu0 %v627
    %676 = vmatprep.subr.mxu0 0.0
    %677 = vmatpush1.msra.mxu0 %v626
    %678 = vmatprep.subr.mxu0 0.0
    %679 = vmatpush1.msra.mxu0 %v625
    %680 = vmatprep.subr.mxu0 0.0
    %681 = vmatpush2.msra.mxu0 0.0
    %682 = vmatprep.subr.mxu0 0.0
    %683 = vmatpush2.msra.mxu0 0.0
    %684 = vmatprep.subr.mxu0 0.0
    %685 = vmatpush2.msra.mxu0 0.0
    %686 = vmatprep.subr.mxu0 0.0
    %687 = vmatpush2.msra.mxu0 0.0
    %688 = vmatprep.subr.mxu0 0.0
    %689 = vmatpush2.msra.mxu0 0.0
    %690 = vmatprep.subr.mxu0 0.0
    %691 = vmatpush2.msra.mxu0 0.0
    %692 = vmatprep.subr.mxu0 0.0
    %693 = vmatpush2.msra.mxu0 0.0
    %694 = vmatprep.subr.mxu0 0.0
    %695 = vmatpush2.msra.mxu0 0.0
    %696 = vmatprep.subr.mxu0 0.0
    %697 = vmatpush2.msra.mxu0 0.0
    %698 = vmatprep.subr.mxu0 0.0
    %699 = vmatpush2.msra.mxu0 0.0
    %700 = vmatprep.subr.mxu0 0.0
    %701 = vmatpush2.msra.mxu0 0.0
    %702 = vmatprep.subr.mxu0 0.0
    %703 = vmatpush2.msra.mxu0 0.0
    %704 = vmatprep.subr.mxu0 0.0
    %705 = vmatpush2.msra.mxu0 0.0
    %706 = vmatprep.subr.mxu0 0.0
    %707 = vmatpush2.msra.mxu0 0.0
    %708 = vmatprep.subr.mxu0 0.0
    %709 = vmatpush2.msra.mxu0 0.0
    %710 = vmatprep.subr.mxu0 0.0
    %711 = vmatpush2.msra.mxu0 0.0
    %712 = vmatprep.mubr.f32.mxu0 0.0
    %713 = vmatmul.mubr.f32.gmra.mxu0 %v623
    %v714 = vpop.f32.mrf.mxu0
    %v715 = vadd.f32 %v646, %v714
    %v716 = vpop.f32.mrf.mxu0
    %717 = vmatprep.mubr.f32.mxu0 0.0
    %718 = vmatmul.mubr.f32.gmra.mxu0 %v624
    %v719 = vpop.f32.mrf.mxu0
    %v720 = vadd.f32 %v646, %v719
    %v721 = vpop.f32.mrf.mxu0
    %722 = vdwg.mxu0
    %723 = vmax.xlane.f32.xlu0 %v715
    %v724 = vpop.xlane.xlu0 %723
    %725 = vmax.xlane.f32.xlu0 %v720
    %v726 = vpop.xlane.xlu0 %725
    %v727 = vsub.f32 %v715, %v724
    %v728 = vsub.f32 %v720, %v726
    %v729 = vmul.f32 %v727, 1.442695
    %v730 = vpow.pop %v729
    %v731 = vmul.f32 %v728, 1.442695
    %v732 = vpow.pop %v731
    %733 = vadd.xlane.f32.xlu0 %v730
    %v734 = vpop.xlane.xlu0 %733
    %735 = vadd.xlane.f32.xlu0 %v732
    %v736 = vpop.xlane.xlu0 %735
    %v737 = vrcp.pop %v734
    %v738 = vrcp.pop %v736
    %v739 = vmul.f32 %v730, %v737
    %v740 = vmul.f32 %v732, %v738
    %v741 = vpack.c.bf16 %v740, %v739
    %v743 = vunpack.c.l.b16 %v741
    %v744 = vunpack.c.h.b16 %v741
    %v745 = vpack.c.b16 %v743, %v743
    %v746 = vpack.c.b16 %v744, %v744
    %749 = vst [vmem:[%s5] sm:$0xf] %v745
    %750 = vst [vmem:[%s5 + $0x4] sm:$0xf] %v746
    // Predicated region
    $region26: #{simple_nn_forward.1} parent=1 // pred_check
      _
    $region27: #{simple_nn_forward.1} parent=1 // pred_check_branch
      %752 = sbr.rel (0) target = $region29
    $region28: #{simple_nn_forward.1} parent=1 // pred_region
      _
    $region29: #{simple_nn_forward.1} parent=1 // pred_fallthru
      _
    // Predicated region
    $region30: #{simple_nn_forward.1} parent=1 // pred_check
      _
    $region31: #{simple_nn_forward.1} parent=1 // pred_check_branch
      %754 = sbr.rel (0) target = $region33
    $region32: #{simple_nn_forward.1} parent=1 // pred_region
      _
    $region33: #{simple_nn_forward.1} parent=1 // pred_fallthru
      _
    %755 = vsyncpa [#allocation3], 1

</llo_original>
